<compile_context>
chip_gen: v5e
topology: v5e:2x2
jax: 0.10.0
libtpu: 0.0.40
codegen_flags: <defaults>
</compile_context>

<pallas_src>
import jax
import jax.numpy as jnp
from jax.experimental import pallas as pl
from jax.experimental.pallas import tpu as pltpu


def _perceptron_kernel(bias_ref, x_ref, w_ref, o_ref):
    # x_ref: (TILE_N, F) f32 VMEM, w_ref: (F, 1) f32 VMEM (resident),
    # bias_ref: (1, 1) f32 SMEM, o_ref: (TILE_N, 1) int32 VMEM.
    z = jnp.dot(x_ref[...], w_ref[...], preferred_element_type=jnp.float32)
    z = z + bias_ref[0, 0]
    # step(z): 1 where z >= 0 else 0 (integer output, like torch.where(z>=0,1,0))
    o_ref[...] = jnp.where(z >= 0.0, 1, 0).astype(jnp.int32)


def _choose_tile_n(N, F, bytes_per_elem=4):
    """Pick a batch tile that keeps 2 double-buffered x tiles <= ~16 MiB
    (fits v7x's scoped VMEM with headroom; also fine on v5e/v6e)."""
    budget = 16 * 1024 * 1024
    max_rows = max(8, budget // (2 * max(F, 1) * bytes_per_elem))
    tile = min(N, 2048, max_rows)
    if tile < N:
        # second-to-last block dim must be a multiple of 8 when not full-extent
        tile = max(8, (tile // 8) * 8)
    return tile


def perceptron_forward(x, weights, bias, *, tile_n=None):
    """x: (N, F) f32, weights: (F,) f32, bias: scalar f32 -> (N,) int32."""
    x = jnp.asarray(x, jnp.float32)
    w = jnp.asarray(weights, jnp.float32).reshape(-1, 1)   # (F, 1)
    b = jnp.asarray(bias, jnp.float32).reshape(1, 1)       # (1, 1) scalar -> SMEM
    N, F = x.shape

    if tile_n is None:
        tile_n = _choose_tile_n(N, F)
    tile_n = min(tile_n, N)
    grid = (pl.cdiv(N, tile_n),)

    out = pl.pallas_call(
        _perceptron_kernel,
        out_shape=jax.ShapeDtypeStruct((N, 1), jnp.int32),
        grid_spec=pltpu.PrefetchScalarGridSpec(
            num_scalar_prefetch=0,
            grid=grid,
            in_specs=[
                pl.BlockSpec((1, 1), lambda i: (0, 0),
                             memory_space=pltpu.SMEM),          # bias scalar (resident)
                pl.BlockSpec((tile_n, F), lambda i: (i, 0)),    # x, tiled over batch
                pl.BlockSpec((F, 1), lambda i: (0, 0)),         # weights column (resident)
            ],
            out_specs=pl.BlockSpec((tile_n, 1), lambda i: (i, 0)),
        ),
        compiler_params=pltpu.CompilerParams(
            dimension_semantics=("parallel",),          # megacore-shardable on v7x
            vmem_limit_bytes=32 * 1024 * 1024,          # explicit (v5e default is 16 MiB)
        ),
        cost_estimate=pl.CostEstimate(
            flops=2 * N * F,
            transcendentals=0,
            bytes_accessed=N * F * 4 + F * 4 + 4 + N * 4,
        ),
    )(b, x, w)
    # TODO(synk): for very large F, add a K (feature) grid axis with a VMEM
    # f32 accumulator (pl.when init/finalize); not needed at these sizes.
    return out.reshape(N)   # match torch.matmul(x, w_vec) -> (N,)


def perceptron_reference(x, weights, bias):
    z = jnp.matmul(x, weights) + bias
    return jnp.where(z >= 0, 1, 0).astype(jnp.int32)


if __name__ == "__main__":
    key = jax.random.PRNGKey(0)

    # Case 1: small perceptron matching the original module usage (F=4 features).
    kx, kw, kb = jax.random.split(key, 3)
    N, F = 8, 4
    x = jax.random.normal(kx, (N, F), dtype=jnp.float32)
    weights = jax.random.normal(kw, (F,), dtype=jnp.float32)
    bias = jax.random.normal(kb, (), dtype=jnp.float32)

    out = jax.block_until_ready(perceptron_forward(x, weights, bias))
    ref = perceptron_reference(x, weights, bias)
    assert out.shape == ref.shape, (out.shape, ref.shape)
    assert bool(jnp.all(out == ref)), "Pallas kernel mismatch vs reference (case 1)"

    # Case 2: exercise the batch tiling path (multi-block grid + partial last block).
    kx2, kw2, kb2 = jax.random.split(jax.random.PRNGKey(0), 3)
    N2, F2 = 300, 32
    x2 = jax.random.normal(kx2, (N2, F2), dtype=jnp.float32)
    weights2 = jax.random.normal(kw2, (F2,), dtype=jnp.float32)
    bias2 = jax.random.normal(kb2, (), dtype=jnp.float32)

    out2 = jax.block_until_ready(
        perceptron_forward(x2, weights2, bias2, tile_n=128))
    ref2 = perceptron_reference(x2, weights2, bias2)
    assert out2.shape == ref2.shape, (out2.shape, ref2.shape)
    assert bool(jnp.all(out2 == ref2)), "Pallas kernel mismatch vs reference (case 2)"

    print("KERNEL_OK")
</pallas_src>

<mosaic_0001>
module attributes {stable_mosaic.version = 11 : i64} {
  func.func @_perceptron_kernel(%arg0: i32, %arg1: memref<1x1xf32, #tpu.memory_space<smem>>, %arg2: memref<8x4xf32, #tpu.memory_space<vmem>>, %arg3: memref<4x1xf32, #tpu.memory_space<vmem>>, %arg4: memref<8x1xi32, #tpu.memory_space<vmem>>) attributes {dimension_semantics = [#tpu.dimension_semantics<parallel>], iteration_bounds = array<i64: 1>, scalar_prefetch = 0 : i64, scratch_operands = 0 : i64, tpu.core_type = #tpu.core_type<tc>, window_params = [{transform_indices = @transform_0, window_bounds = array<i64: 1, 1>}, {transform_indices = @transform_1, window_bounds = array<i64: 8, 4>}, {pipeline_mode = #tpu.pipeline_mode<synchronous>, transform_indices = @transform_2, window_bounds = array<i64: 4, 1>}, {transform_indices = @transform_3, window_bounds = array<i64: 8, 1>}]} {
    %c0 = arith.constant 0 : index
    %c0_0 = arith.constant 0 : index
    %0 = vector.load %arg2[%c0, %c0_0] : memref<8x4xf32, #tpu.memory_space<vmem>>, vector<8x4xf32>
    %c0_1 = arith.constant 0 : index
    %c0_2 = arith.constant 0 : index
    %1 = vector.load %arg3[%c0_1, %c0_2] : memref<4x1xf32, #tpu.memory_space<vmem>>, vector<4x1xf32>
    %cst = arith.constant dense<0.000000e+00> : vector<8x1xf32>
    %2 = tpu.matmul %0, %1, %cst {dimension_numbers = #tpu.dot_dimension_numbers<[1], [0], [0], [1], [0, 0, 1, 1], [], []>} : vector<8x4xf32>, vector<4x1xf32>, vector<8x1xf32> -> vector<8x1xf32>
    %c0_3 = arith.constant 0 : index
    %c0_4 = arith.constant 0 : index
    %3 = memref.load %arg1[%c0_3, %c0_4] : memref<1x1xf32, #tpu.memory_space<smem>>
    %4 = vector.broadcast %3 : f32 to vector<8x1xf32>
    %5 = arith.addf %2, %4 : vector<8x1xf32>
    %cst_5 = arith.constant 0.000000e+00 : f32
    %6 = vector.broadcast %cst_5 : f32 to vector<8x1xf32>
    %7 = arith.cmpf oge, %5, %6 : vector<8x1xf32>
    %c1_i32 = arith.constant 1 : i32
    %c0_i32 = arith.constant 0 : i32
    %8 = vector.broadcast %c1_i32 : i32 to vector<8x1xi32>
    %9 = vector.broadcast %c0_i32 : i32 to vector<8x1xi32>
    %10 = arith.select %7, %8, %9 : vector<8x1xi1>, vector<8x1xi32>
    %c0_6 = arith.constant 0 : index
    %c0_7 = arith.constant 0 : index
    %11 = vector.load %arg4[%c0_6, %c0_7] : memref<8x1xi32, #tpu.memory_space<vmem>>, vector<8x1xi32>
    tpu.vector_store %arg4[%c0_6, %c0_7], %10 {strides = array<i32>} : memref<8x1xi32, #tpu.memory_space<vmem>>, vector<8x1xi32>,
    return
  }
  func.func @transform_0(%arg0: i32) -> (i32, i32) {
    %c0_i32 = arith.constant 0 : i32
    %c0_i32_0 = arith.constant 0 : i32
    %c0_i32_1 = arith.constant 0 : i32
    return %c0_i32, %c0_i32_0 : i32, i32
  }
  func.func @transform_1(%arg0: i32) -> (i32, i32) {
    %c0_i32 = arith.constant 0 : i32
    %c0_i32_0 = arith.constant 0 : i32
    return %arg0, %c0_i32 : i32, i32
  }
  func.func @transform_2(%arg0: i32) -> (i32, i32) {
    %c0_i32 = arith.constant 0 : i32
    %c0_i32_0 = arith.constant 0 : i32
    %c0_i32_1 = arith.constant 0 : i32
    return %c0_i32, %c0_i32_0 : i32, i32
  }
  func.func @transform_3(%arg0: i32) -> (i32, i32) {
    %c0_i32 = arith.constant 0 : i32
    %c0_i32_0 = arith.constant 0 : i32
    return %arg0, %c0_i32 : i32, i32
  }
}

</mosaic_0001>

<llo_original>
// kernel: tpu_custom_call.1
$region0: #{tpu_custom_call.1}
  #allocation0 [shape = 'u32[]', space=smem, size = 0x4, offset = 0x4, fixed_abs, tag = 'smem constant byte address 0x4 - core index']
  #allocation1 [shape = 'u32[72,128]{1,0:T(1,128)}', space=vmem, size = 0x9000, scoped, tag = 'internal scratch']
  #allocation2 [shape = 'f32[1,1]{1,0:T(1,128)S(6)}', space=smem, size = 0x200, scoped, tag = 'scoped memory for tpu_custom_call.1']
  %s0 = inlined_call_operand.<no memory space> [shape: f32[1,1], index: 0, kind: input, shape index: {}]
  %s1 = inlined_call_operand.vmem [shape: f32[8,4], index: 1, kind: input, shape index: {}]
  %s2 = inlined_call_operand.vmem [shape: f32[4,1], index: 2, kind: input, shape index: {}]
  %s3 = inlined_call_operand.vmem [shape: s32[8,1], index: 3, kind: output, shape index: {}]
  %s4 = sld [smem:[#allocation0]]
  $region22: #{tpu_custom_call.1} parent=0
    _
  %s6 = ssub.s32 1, %s4
  %s7 = scalar_select 0, %s6, %s4
  %8 = sst [smem:[#allocation2]] %s0
  // Predicated region
  $region2: #{tpu_custom_call.1} parent=0 // pred_check
    _
  $region3: #{tpu_custom_call.1} parent=0 // pred_check_branch
    %10 = sbr.rel (0) target = $region5
  $region4: #{tpu_custom_call.1} parent=0 // pred_region
    _
  $region5: #{tpu_custom_call.1} parent=0 // pred_fallthru
    _
  // Predicated region
  $region6: #{tpu_custom_call.1} parent=0 // pred_check
    _
  $region7: #{tpu_custom_call.1} parent=0 // pred_check_branch
    %12 = sbr.rel (0) target = $region9
  $region8: #{tpu_custom_call.1} parent=0 // pred_region
    _
  $region9: #{tpu_custom_call.1} parent=0 // pred_fallthru
    _
  // Predicated region
  $region10: #{tpu_custom_call.1} parent=0 // pred_check
    _
  $region11: #{tpu_custom_call.1} parent=0 // pred_check_branch
    %14 = sbr.rel (0) target = $region13
  $region12: #{tpu_custom_call.1} parent=0 // pred_region
    _
  $region13: #{tpu_custom_call.1} parent=0 // pred_fallthru
    _
  %v15 = vld [vmem:[%s1] sm:$0xff]
  %v16 = vld [vmem:[%s2] sm:$0xf]
  %s17 = sld [smem:[#allocation2]]
  %v18 = vstv %s17
  %vm19 = vcmask 31744
  %v21 = vsel %vm19, %v15, 0
  %vm23 = vcmask 1043456
  %v25 = vsel %vm23, %v16, 0
  %27 = vmatpush.msra.mxu0 0.0
  %28 = vmatpush.msra.mxu0 0.0
  %29 = vmatpush.msra.mxu0 0.0
  %30 = vmatpush.msra.mxu0 0.0
  %31 = vmatpush.msra.mxu0 0.0
  %32 = vmatpush.msra.mxu0 0.0
  %33 = vmatpush.msra.mxu0 0.0
  %34 = vmatpush.msra.mxu0 0.0
  %35 = vmatpush.msra.mxu0 0.0
  %36 = vmatpush.msra.mxu0 0.0
  %37 = vmatpush.msra.mxu0 0.0
  %38 = vmatpush.msra.mxu0 0.0
  %39 = vmatpush.msra.mxu0 0.0
  %40 = vmatpush.msra.mxu0 0.0
  %41 = vmatpush.msra.mxu0 0.0
  %42 = vmatpush.msra.mxu0 %v25
  %43 = vmatmul.f32.gmra.mxu0 %v21
  %v44 = vpop.f32.mrf.mxu0
  %v45 = vadd.f32 %v18, %v44
  %46 = vdwg.mxu0
  %vm47 = vcmp.ge.f32.partialorder %v45, 0.0
  %v48 = vsel %vm47, 1, 0
  %vm49 = vcmask 7168
  %50 = vst.msk [vmem:[%s3] sm:$0xff] %vm49, %v48
  // Predicated region
  $region14: #{tpu_custom_call.1} parent=0 // pred_check
    _
  $region15: #{tpu_custom_call.1} parent=0 // pred_check_branch
    %52 = sbr.rel (0) target = $region17
  $region16: #{tpu_custom_call.1} parent=0 // pred_region
    _
  $region17: #{tpu_custom_call.1} parent=0 // pred_fallthru
    _
  // Predicated region
  $region18: #{tpu_custom_call.1} parent=0 // pred_check
    _
  $region19: #{tpu_custom_call.1} parent=0 // pred_check_branch
    %54 = sbr.rel (0) target = $region21
  $region20: #{tpu_custom_call.1} parent=0 // pred_region
    _
  $region21: #{tpu_custom_call.1} parent=0 // pred_fallthru
    _

</llo_original>
